<compile_context>
chip_gen: v7x
topology: tpu7x:2x2x1
jax: 0.10.0
libtpu: 0.0.40
codegen_flags: <defaults>
</compile_context>

<pallas_src>
import math

import jax
import jax.numpy as jnp
import numpy as np
from jax.experimental import pallas as pl
from jax.experimental.pallas import tpu as pltpu


def _round_up(x, m):
    return (x + m - 1) // m * m


# -----------------------------------------------------------------------------
# In-kernel MLP layers.  PyTorch nn.Linear semantics (y = x @ W^T + b); weights
# are pre-transposed to (in, out) and passed as bf16 MXU operands, biases f32.
# -----------------------------------------------------------------------------
def _apply_layers(x, param_refs, relu_after_last):
    n_lin = len(param_refs) // 2
    h = x
    for i in range(n_lin):
        w = param_refs[2 * i][...]           # (in, out) bf16
        bias = param_refs[2 * i + 1][...]    # (1, out)  f32
        if w.shape[0] == 1:
            # K == 1 (e.g. trunk_input_dim = 1): VPU broadcast-multiply instead
            # of a degenerate K=1 MXU matmul.
            h = h * w.astype(jnp.float32) + bias
        else:
            h = jnp.dot(h.astype(jnp.bfloat16), w,
                        preferred_element_type=jnp.float32) + bias
        if (i < n_lin - 1) or relu_after_last:
            h = jnp.maximum(h, 0.0)          # nn.ReLU
    return h


# -----------------------------------------------------------------------------
# 3-D trunk input: grid = (n_tiles, B), B is the fast ("arbitrary") axis.
# Each step: trunk MLP on one (tile_n, D) row tile of one batch, contract with
# that batch's V row -> lane-dense (1, tile_n), stash into VMEM scratch; the
# full (B, tile_n) output block is written once at the last batch step.
# -----------------------------------------------------------------------------
def _trunk_kernel_3d(tx_ref, v_ref, c_ref, *refs):
    out_ref, acc_ref = refs[-2], refs[-1]
    pre_prm = refs[:-2]
    b = pl.program_id(1)

    h = _apply_layers(tx_ref[0], pre_prm, relu_after_last=True)        # (tile_n, H) f32
    v = v_ref[pl.ds(b, 1), :].astype(jnp.bfloat16)                     # (1, H)
    row = jax.lax.dot_general(
        v, h.astype(jnp.bfloat16),
        dimension_numbers=(((1,), (1,)), ((), ())),
        preferred_element_type=jnp.float32)                            # (1, tile_n)
    acc_ref[pl.ds(b, 1), :] = row + c_ref[pl.ds(b, 1), :]

    @pl.when(b == pl.num_programs(1) - 1)
    def _():
        out_ref[...] = acc_ref[...]


# -----------------------------------------------------------------------------
# 2-D trunk input (shared query points): grid = (n_tiles,); all branch rows are
# contracted against one trunk row tile -> lane-dense (B, tile_n) block.
# -----------------------------------------------------------------------------
def _trunk_kernel_2d(tx_ref, v_ref, c_ref, *refs):
    out_ref = refs[-1]
    pre_prm = refs[:-1]
    h = _apply_layers(tx_ref[...], pre_prm, relu_after_last=True)      # (tile_n, H)
    out = jax.lax.dot_general(
        v_ref[...], h.astype(jnp.bfloat16),
        dimension_numbers=(((1,), (1,)), ((), ())),
        preferred_element_type=jnp.float32)                            # (B, tile_n)
    out_ref[...] = out + c_ref[...]


# -----------------------------------------------------------------------------
# Host wrapper.
# -----------------------------------------------------------------------------
def _param_bytes(params):
    return int(sum(p.size * p.dtype.itemsize for p in params))


def _mlp_f32(x, params, relu_after_last=False):
    n = len(params) // 2
    h = x
    for i in range(n):
        h = h @ params[2 * i] + params[2 * i + 1]
        if (i < n - 1) or relu_after_last:
            h = jnp.maximum(h, 0.0)
    return h


def _row_tiling(n_rows, cap=2048):
    """Lane-dense row tile (multiple of 128, <= cap); split so the parallel
    row-tile axis has >= 2 steps when possible (v7x megacore)."""
    tile_n = min(cap, _round_up(n_rows, 128))
    if tile_n >= 256 and _round_up(n_rows, tile_n) == tile_n:
        tile_n = _round_up(tile_n // 2, 128)
    npad = _round_up(n_rows, tile_n)
    return tile_n, npad, npad // tile_n


def _vmem_limit_bytes(param_bytes, tile_n, max_width, batch):
    act = 6 * 4 * tile_n * max(max_width, 1)        # f32 activation chain (generous)
    io = 4 * 4 * tile_n * 8 + 4 * 4 * batch * tile_n  # in tiles + out block + scratch
    total = 2 * param_bytes + act + io + (4 << 20)
    return int(min(max(total, 32 << 20), 60 << 20))


def deeponet_pallas(branch_x, trunk_x, branch_params, trunk_params):
    """Fused DeepONet forward. Returns (B, N) like the PyTorch reference."""
    B = branch_x.shape[0]
    n_trunk_lin = len(trunk_params) // 2
    trunk_pre = tuple(trunk_params[: 2 * (n_trunk_lin - 1)])
    w_last, bias_last = trunk_params[-2], trunk_params[-1]   # (H, p), (1, p) f32
    H = w_last.shape[0]

    # ---- Branch MLP + folding of the last trunk layer (tiny; plain XLA) ----
    b_act = _mlp_f32(branch_x.astype(jnp.float32), branch_params)       # (B, p) f32
    V = b_act @ w_last.T                                                # (B, H) f32
    c = jnp.sum(b_act * bias_last, axis=-1, keepdims=True)              # (B, 1) f32

    # bf16 copies of the trunk "pre" weights (MXU operands); biases stay f32.
    pre_kernel = []
    for i in range(len(trunk_pre) // 2):
        pre_kernel.append(trunk_pre[2 * i].astype(jnp.bfloat16))
        pre_kernel.append(trunk_pre[2 * i + 1])
    pre_kernel = tuple(pre_kernel)

    if trunk_x.ndim == 3:
        Bt, N, D = trunk_x.shape
        if Bt != B:
            raise ValueError(f"branch batch {B} != trunk batch {Bt}")
    elif trunk_x.ndim == 2:
        N, D = trunk_x.shape
    else:
        raise ValueError(f"Unsupported trunk_input ndim: {trunk_x.ndim}")

    tile_n, npad, n_tiles = _row_tiling(N)

    widths = [D, H] + [pre_kernel[2 * i].shape[1] for i in range(len(pre_kernel) // 2)]
    pre_flops_row = 2 * sum(pre_kernel[2 * i].shape[0] * pre_kernel[2 * i].shape[1]
                            for i in range(len(pre_kernel) // 2))
    prm_bytes = _param_bytes(pre_kernel)
    vmem_limit = _vmem_limit_bytes(prm_bytes, tile_n, max(widths), B)

    # Weights/biases, V, c: full-shape blocks, constant index maps -> VMEM-resident.
    wspecs = [pl.BlockSpec(p.shape, lambda *_: (0, 0)) for p in pre_kernel]
    v_spec = pl.BlockSpec((B, H), lambda *_: (0, 0))
    c_spec = pl.BlockSpec((B, 1), lambda *_: (0, 0))

    if trunk_x.ndim == 3:
        tx = jnp.pad(trunk_x.astype(jnp.float32), ((0, 0), (0, npad - N), (0, 0)))
        cost = pl.CostEstimate(
            flops=int(B * npad * (pre_flops_row + 2 * H)),
            transcendentals=0,
            bytes_accessed=int(4 * B * npad * (D + 1) + prm_bytes + 4 * B * (H + 1)))
        out = pl.pallas_call(
            _trunk_kernel_3d,
            out_shape=jax.ShapeDtypeStruct((B, npad), jnp.float32),
            grid=(n_tiles, B),
            in_specs=[pl.BlockSpec((1, tile_n, D), lambda j, b: (b, j, 0)),
                      v_spec, c_spec, *wspecs],
            out_specs=pl.BlockSpec((B, tile_n), lambda j, b: (0, j)),
            scratch_shapes=[pltpu.VMEM((B, tile_n), jnp.float32)],
            compiler_params=pltpu.CompilerParams(
                dimension_semantics=("parallel", "arbitrary"),
                vmem_limit_bytes=vmem_limit),
            cost_estimate=cost,
        )(tx, V, c, *pre_kernel)
        return out[:, :N]

    # 2-D trunk input: shared query points, out = branch @ trunk(y)^T.
    tx = jnp.pad(trunk_x.astype(jnp.float32), ((0, npad - N), (0, 0)))
    cost = pl.CostEstimate(
        flops=int(npad * (pre_flops_row + 2 * H * B)),
        transcendentals=0,
        bytes_accessed=int(4 * npad * (D + B) + prm_bytes + 4 * B * (H + 1)))
    out = pl.pallas_call(
        _trunk_kernel_2d,
        out_shape=jax.ShapeDtypeStruct((B, npad), jnp.float32),
        grid=(n_tiles,),
        in_specs=[pl.BlockSpec((tile_n, D), lambda j: (j, 0)),
                  v_spec, c_spec, *wspecs],
        out_specs=pl.BlockSpec((B, tile_n), lambda j: (0, j)),
        compiler_params=pltpu.CompilerParams(
            dimension_semantics=("parallel",),
            vmem_limit_bytes=vmem_limit),
        cost_estimate=cost,
    )(tx, V.astype(jnp.bfloat16), c, *pre_kernel)
    return out[:, :N]


# -----------------------------------------------------------------------------
# Parameter construction (deterministic, mimics nn.Linear default init).
# Master weights stay f32 (cast to bf16 only at the MXU operand); weights are
# stored pre-transposed as (in, out); biases as (1, out).
# -----------------------------------------------------------------------------
def init_mlp_params(key, input_dim, hidden_dims, output_dim):
    dims = [input_dim] + list(hidden_dims) + [output_dim]
    params = []
    for i in range(len(dims) - 1):
        key, kw, kb = jax.random.split(key, 3)
        bound = 1.0 / math.sqrt(dims[i])
        w = jax.random.uniform(kw, (dims[i], dims[i + 1]), jnp.float32, -bound, bound)
        b = jax.random.uniform(kb, (1, dims[i + 1]), jnp.float32, -bound, bound)
        params += [w, b]
    return params, key


class DeepONetPallas:
    """JAX/Pallas port of DeepONet.forward (branch/trunk nets = Linear+ReLU MLPs)."""

    # TODO(synk): the spec accepts arbitrary branch_net / trunk_net nn.Modules;
    # this port implements the standard MLP (Linear + ReLU) sub-networks.

    def __init__(self, branch_input_dim, trunk_input_dim=1, p=32,
                 trunk_hidden_size=256, n_trunk_layers=4,
                 branch_hidden_size=256, n_branch_layers=4,
                 key=jax.random.PRNGKey(0)):
        self.branch_input_dim = branch_input_dim
        self.trunk_input_dim = trunk_input_dim
        self.p = p
        self.branch_params, key = init_mlp_params(
            key, branch_input_dim, [branch_hidden_size] * n_branch_layers, p)
        self.trunk_params, key = init_mlp_params(
            key, trunk_input_dim, [trunk_hidden_size] * n_trunk_layers, p)

    def forward(self, branch_input, trunk_input):
        return deeponet_pallas(branch_input, trunk_input,
                               self.branch_params, self.trunk_params)

    __call__ = forward


# -----------------------------------------------------------------------------
# Pure-JAX reference (mirrors the PyTorch code path) for correctness check.
# -----------------------------------------------------------------------------
def deeponet_ref(model, branch_input, trunk_input):
    b = _mlp_f32(branch_input.astype(jnp.float32), model.branch_params)
    if trunk_input.ndim == 2:
        t = _mlp_f32(trunk_input.astype(jnp.float32), model.trunk_params)
        return b @ t.T
    B, N, D = trunk_input.shape
    t = _mlp_f32(trunk_input.reshape(B * N, D).astype(jnp.float32),
                 model.trunk_params).reshape(B, N, -1)
    return jnp.sum(b[:, None, :] * t, axis=-1)


if __name__ == "__main__":
    key = jax.random.PRNGKey(0)
    B = 2                  # batch
    branch_input_dim = 16  # sensor points for u
    N = 8                  # query points per sample
    trunk_input_dim = 1
    p = 32
    hidden = 64
    n_layers = 2

    model = DeepONetPallas(
        branch_input_dim=branch_input_dim, trunk_input_dim=trunk_input_dim,
        p=p, trunk_hidden_size=hidden, n_trunk_layers=n_layers,
        branch_hidden_size=hidden, n_branch_layers=n_layers,
        key=jax.random.PRNGKey(42))

    k1, k2, k3 = jax.random.split(key, 3)
    branch_in = jax.random.normal(k1, (B, branch_input_dim), jnp.float32)
    trunk_in_3d = jax.random.normal(k2, (B, N, trunk_input_dim), jnp.float32)
    trunk_in_2d = jax.random.normal(k3, (N, trunk_input_dim), jnp.float32)

    # 3-D trunk path (per-sample query points)
    out3 = model.forward(branch_in, trunk_in_3d)
    jax.block_until_ready(out3)
    ref3 = deeponet_ref(model, branch_in, trunk_in_3d)
    np.testing.assert_allclose(np.asarray(out3), np.asarray(ref3),
                               rtol=2e-2, atol=2e-2)
    assert out3.shape == (B, N)

    # 2-D trunk path (shared query points)
    out2 = model.forward(branch_in, trunk_in_2d)
    jax.block_until_ready(out2)
    ref2 = deeponet_ref(model, branch_in, trunk_in_2d)
    np.testing.assert_allclose(np.asarray(out2), np.asarray(ref2),
                               rtol=2e-2, atol=2e-2)
    assert out2.shape == (B, N)

    print("KERNEL_OK")
</pallas_src>

<mosaic_0001>
module attributes {stable_mosaic.version = 11 : i64} {
  func.func @_trunk_kernel_3d(%arg0: i32, %arg1: i32, %arg2: memref<1x128x1xf32, #tpu.memory_space<vmem>>, %arg3: memref<2x64xf32, #tpu.memory_space<vmem>>, %arg4: memref<2x1xf32, #tpu.memory_space<vmem>>, %arg5: memref<1x64xbf16, #tpu.memory_space<vmem>>, %arg6: memref<1x64xf32, #tpu.memory_space<vmem>>, %arg7: memref<64x64xbf16, #tpu.memory_space<vmem>>, %arg8: memref<1x64xf32, #tpu.memory_space<vmem>>, %arg9: memref<2x128xf32, #tpu.memory_space<vmem>>, %arg10: memref<2x128xf32, #tpu.memory_space<vmem>>) attributes {dimension_semantics = [#tpu.dimension_semantics<parallel>, #tpu.dimension_semantics<arbitrary>], iteration_bounds = array<i64: 1, 2>, scalar_prefetch = 0 : i64, scratch_operands = 1 : i64, tpu.core_type = #tpu.core_type<tc>, window_params = [{transform_indices = @transform_0, window_bounds = array<i64: 1, 128, 1>}, {pipeline_mode = #tpu.pipeline_mode<synchronous>, transform_indices = @transform_1, window_bounds = array<i64: 2, 64>}, {pipeline_mode = #tpu.pipeline_mode<synchronous>, transform_indices = @transform_2, window_bounds = array<i64: 2, 1>}, {pipeline_mode = #tpu.pipeline_mode<synchronous>, transform_indices = @transform_3, window_bounds = array<i64: 1, 64>}, {pipeline_mode = #tpu.pipeline_mode<synchronous>, transform_indices = @transform_4, window_bounds = array<i64: 1, 64>}, {pipeline_mode = #tpu.pipeline_mode<synchronous>, transform_indices = @transform_5, window_bounds = array<i64: 64, 64>}, {pipeline_mode = #tpu.pipeline_mode<synchronous>, transform_indices = @transform_6, window_bounds = array<i64: 1, 64>}, {transform_indices = @transform_7, window_bounds = array<i64: 2, 128>}]} {
    %c0 = arith.constant 0 : index
    %c0_0 = arith.constant 0 : index
    %c0_1 = arith.constant 0 : index
    %0 = vector.load %arg2[%c0, %c0_0, %c0_1] : memref<1x128x1xf32, #tpu.memory_space<vmem>>, vector<1x128x1xf32>
    %1 = vector.shape_cast %0 : vector<1x128x1xf32> to vector<128x1xf32>
    %c0_2 = arith.constant 0 : index
    %c0_3 = arith.constant 0 : index
    %2 = vector.load %arg5[%c0_2, %c0_3] : memref<1x64xbf16, #tpu.memory_space<vmem>>, vector<1x64xbf16>
    %c0_4 = arith.constant 0 : index
    %c0_5 = arith.constant 0 : index
    %3 = vector.load %arg6[%c0_4, %c0_5] : memref<1x64xf32, #tpu.memory_space<vmem>>, vector<1x64xf32>
    %4 = arith.extf %2 : vector<1x64xbf16> to vector<1x64xf32>
    %5 = vector.broadcast %1 : vector<128x1xf32> to vector<128x64xf32>
    %6 = vector.broadcast %4 : vector<1x64xf32> to vector<128x64xf32>
    %7 = arith.mulf %5, %6 : vector<128x64xf32>
    %8 = vector.broadcast %3 : vector<1x64xf32> to vector<128x64xf32>
    %9 = arith.addf %7, %8 : vector<128x64xf32>
    %cst = arith.constant 0.000000e+00 : f32
    %10 = vector.broadcast %cst : f32 to vector<128x64xf32>
    %11 = arith.maximumf %9, %10 : vector<128x64xf32>
    %c0_6 = arith.constant 0 : index
    %c0_7 = arith.constant 0 : index
    %12 = vector.load %arg7[%c0_6, %c0_7] : memref<64x64xbf16, #tpu.memory_space<vmem>>, vector<64x64xbf16>
    %c0_8 = arith.constant 0 : index
    %c0_9 = arith.constant 0 : index
    %13 = vector.load %arg8[%c0_8, %c0_9] : memref<1x64xf32, #tpu.memory_space<vmem>>, vector<1x64xf32>
    %14 = arith.truncf %11 : vector<128x64xf32> to vector<128x64xbf16>
    %cst_10 = arith.constant dense<0.000000e+00> : vector<128x64xf32>
    %15 = tpu.matmul %14, %12, %cst_10 {dimension_numbers = #tpu.dot_dimension_numbers<[1], [0], [0], [1], [0, 0, 1, 1], [], []>} : vector<128x64xbf16>, vector<64x64xbf16>, vector<128x64xf32> -> vector<128x64xf32>
    %16 = vector.broadcast %13 : vector<1x64xf32> to vector<128x64xf32>
    %17 = arith.addf %15, %16 : vector<128x64xf32>
    %cst_11 = arith.constant 0.000000e+00 : f32
    %18 = vector.broadcast %cst_11 : f32 to vector<128x64xf32>
    %19 = arith.maximumf %17, %18 : vector<128x64xf32>
    %20 = arith.index_cast %arg1 : i32 to index
    %c0_12 = arith.constant 0 : index
    %21 = vector.load %arg3[%20, %c0_12] : memref<2x64xf32, #tpu.memory_space<vmem>>, vector<1x64xf32>
    %22 = arith.truncf %21 : vector<1x64xf32> to vector<1x64xbf16>
    %23 = arith.truncf %19 : vector<128x64xf32> to vector<128x64xbf16>
    %cst_13 = arith.constant dense<0.000000e+00> : vector<1x128xf32>
    %24 = tpu.matmul %22, %23, %cst_13 {dimension_numbers = #tpu.dot_dimension_numbers<[1], [1], [0], [0], [0, 0, 1, 0], [], []>} : vector<1x64xbf16>, vector<128x64xbf16>, vector<1x128xf32> -> vector<1x128xf32>
    %25 = arith.index_cast %arg1 : i32 to index
    %c0_14 = arith.constant 0 : index
    %26 = vector.load %arg4[%25, %c0_14] : memref<2x1xf32, #tpu.memory_space<vmem>>, vector<1x1xf32>
    %27 = vector.broadcast %26 : vector<1x1xf32> to vector<1x128xf32>
    %28 = arith.addf %24, %27 : vector<1x128xf32>
    %29 = arith.index_cast %arg1 : i32 to index
    %c0_15 = arith.constant 0 : index
    %30 = vector.load %arg10[%29, %c0_15] : memref<2x128xf32, #tpu.memory_space<vmem>>, vector<1x128xf32>
    tpu.vector_store %arg10[%29, %c0_15], %28 {strides = array<i32>} : memref<2x128xf32, #tpu.memory_space<vmem>>, vector<1x128xf32>,
    %c1_i32 = arith.constant 1 : i32
    %31 = arith.cmpi eq, %arg1, %c1_i32 : i32
    %32 = arith.extui %31 : i1 to i32
    %c0_i32 = arith.constant 0 : i32
    %33 = arith.cmpi ne, %32, %c0_i32 : i32
    scf.if %33 {
      %c0_16 = arith.constant 0 : index
      %c0_17 = arith.constant 0 : index
      %34 = vector.load %arg10[%c0_16, %c0_17] : memref<2x128xf32, #tpu.memory_space<vmem>>, vector<2x128xf32>
      %c0_18 = arith.constant 0 : index
      %c0_19 = arith.constant 0 : index
      %35 = vector.load %arg9[%c0_18, %c0_19] : memref<2x128xf32, #tpu.memory_space<vmem>>, vector<2x128xf32>
      tpu.vector_store %arg9[%c0_18, %c0_19], %34 {strides = array<i32>} : memref<2x128xf32, #tpu.memory_space<vmem>>, vector<2x128xf32>,
    } else {
    }
    return
  }
  func.func @transform_0(%arg0: i32, %arg1: i32) -> (i32, i32, i32) {
    %c0_i32 = arith.constant 0 : i32
    %c0_i32_0 = arith.constant 0 : i32
    return %arg1, %arg0, %c0_i32 : i32, i32, i32
  }
  func.func @transform_1(%arg0: i32, %arg1: i32) -> (i32, i32) {
    %c0_i32 = arith.constant 0 : i32
    %c0_i32_0 = arith.constant 0 : i32
    %c0_i32_1 = arith.constant 0 : i32
    return %c0_i32, %c0_i32_0 : i32, i32
  }
  func.func @transform_2(%arg0: i32, %arg1: i32) -> (i32, i32) {
    %c0_i32 = arith.constant 0 : i32
    %c0_i32_0 = arith.constant 0 : i32
    %c0_i32_1 = arith.constant 0 : i32
    return %c0_i32, %c0_i32_0 : i32, i32
  }
  func.func @transform_3(%arg0: i32, %arg1: i32) -> (i32, i32) {
    %c0_i32 = arith.constant 0 : i32
    %c0_i32_0 = arith.constant 0 : i32
    %c0_i32_1 = arith.constant 0 : i32
    return %c0_i32, %c0_i32_0 : i32, i32
  }
  func.func @transform_4(%arg0: i32, %arg1: i32) -> (i32, i32) {
    %c0_i32 = arith.constant 0 : i32
    %c0_i32_0 = arith.constant 0 : i32
    %c0_i32_1 = arith.constant 0 : i32
    return %c0_i32, %c0_i32_0 : i32, i32
  }
  func.func @transform_5(%arg0: i32, %arg1: i32) -> (i32, i32) {
    %c0_i32 = arith.constant 0 : i32
    %c0_i32_0 = arith.constant 0 : i32
    %c0_i32_1 = arith.constant 0 : i32
    return %c0_i32, %c0_i32_0 : i32, i32
  }
  func.func @transform_6(%arg0: i32, %arg1: i32) -> (i32, i32) {
    %c0_i32 = arith.constant 0 : i32
    %c0_i32_0 = arith.constant 0 : i32
    %c0_i32_1 = arith.constant 0 : i32
    return %c0_i32, %c0_i32_0 : i32, i32
  }
  func.func @transform_7(%arg0: i32, %arg1: i32) -> (i32, i32) {
    %c0_i32 = arith.constant 0 : i32
    %c0_i32_0 = arith.constant 0 : i32
    return %c0_i32, %arg0 : i32, i32
  }
}

</mosaic_0001>

<llo_original>
// kernel: tpu_custom_call.1
$region0: #{tpu_custom_call.1}
  #allocation0 [shape = 'u32[]', space=smem, size = 0x4, offset = 0x4, fixed_abs, tag = 'smem constant byte address 0x4 - core index']
  #allocation1 [shape = 'u32[144,128]{1,0:T(1,128)}', space=vmem, size = 0x12000, scoped, tag = 'internal scratch']
  #allocation2 [shape = 'f32[2,128]{1,0:T(2,128)}', space=vmem, size = 0x400, scoped, tag = 'scratch operand']
  %s0 = inlined_call_operand.vmem [shape: f32[2,128,1], index: 0, kind: input, shape index: {}]
  %s1 = inlined_call_operand.vmem [shape: f32[2,64], index: 1, kind: input, shape index: {}]
  %s2 = inlined_call_operand.vmem [shape: f32[2,1], index: 2, kind: input, shape index: {}]
  %s3 = inlined_call_operand.vmem [shape: bf16[1,64], index: 3, kind: input, shape index: {}]
  %s4 = inlined_call_operand.vmem [shape: f32[1,64], index: 4, kind: input, shape index: {}]
  %s5 = inlined_call_operand.vmem [shape: bf16[64,64], index: 5, kind: input, shape index: {}]
  %s6 = inlined_call_operand.vmem [shape: f32[1,64], index: 6, kind: input, shape index: {}]
  %s7 = inlined_call_operand.hbm [shape: f32[2,128], index: 7, kind: output, shape index: {}]
  %s8 = sld [smem:[#allocation0]]
  $region65: #{tpu_custom_call.1} parent=0
    _
  %s10 = ssub.s32 1, %s8
  %s11 = scalar_select 0, %s10, %s8
  $region1: #{tpu_custom_call.1} parent=0
    #allocation3 [shape = 'u8[1024]{0}', space=vmem, size = 0x400, scoped, tag = 'output window, operand 0, single buffered']
    #allocation4 [shape = 's32[2]{0}', space=sflag, size = 0x8, scoped, tag = 'scoped memory for tpu_custom_call.1']
    %12 = vsyncpa [#allocation4], 0
    loop: start=0, step=1, limit=4
    $region2: #{tpu_custom_call.1} parent=1 // loop_pre_header
      _
    $region3: #{tpu_custom_call.1} parent=1 // loop_header
      %s14 = sphi 0, %s18
      %p15 = scmp.ge.s32.totalorder %s14, 4
      %s21 = sphi 0, %s33
      %s22 = sphi 0, %s29
      %s23 = sphi 0, %s21
      %s24 = sphi 0, %s22
      %s25 = sphi 0, %s23
      %s26 = sphi 0, %s24
      %s38 = sphi 0, %s40
      %s41 = sphi 0, %s38
      %s42 = sphi 0, %s41
      %s58 = sphi 0, %s42
      %s62 = sphi 0, %s62
      %s64 = sphi 0, %s62
      %s65 = sphi 0, %s64
      %s79 = sphi 0, %s65
      %s83 = sphi 0, %s83
      %s85 = sphi 0, %s83
      %s86 = sphi 0, %s85
      %s100 = sphi 0, %s86
      %s104 = sphi 0, %s104
      %s106 = sphi 0, %s104
      %s107 = sphi 0, %s106
      %s121 = sphi 0, %s107
      %s125 = sphi 0, %s125
      %s127 = sphi 0, %s125
      %s128 = sphi 0, %s127
      %s142 = sphi 0, %s128
      %s146 = sphi 0, %s146
      %s148 = sphi 0, %s146
      %s149 = sphi 0, %s148
      %s163 = sphi 0, %s149
      %s167 = sphi 0, %s167
      %s169 = sphi 0, %s167
      %s170 = sphi 0, %s169
      %s184 = sphi 0, %s170
      %s190 = sphi 0, %s192
      %s193 = sphi 0, %s190
      %s194 = sphi 0, %s193
      %s210 = sphi 0, %s194
    $region4: #{tpu_custom_call.1} parent=1 // loop_header_branch
      %17 = sbr.rel (%p15) target = $region8
    $region5: #{tpu_custom_call.1} parent=1 // loop_body
      %s19 = ssub.s32 %s14, 1
      %s20 = ssub.s32 %s14, 2
      %s27 = sadd.s32 1, %s22
      %p28 = scmp.ge.s32.totalorder %s27, 2
      %s29 = scalar_select %p28, 0, %s27
      %s30 = sadd.s32 1, %s21
      %s31 = scalar_select %p28, %s30, %s21
      %p32 = scmp.ge.s32.totalorder %s31, 1
      %s33 = scalar_select %p32, 0, %s31
      %s34 = ssub.s32 %s22, %s29
      %s35 = ssub.s32 %s21, %s33
      %s36 = sor.u32 %s34, %s35
      %p37 = scmp.eq.s32.totalorder %s36, 0
      %s39 = sadd.s32 %s38, 1
      %s40 = scalar_select %p37, %s38, %s39
      %p43 = pneg %p37
      %p44 = scmp.eq.s32.totalorder %s14, 1
      %p45 = por %p43, %p44
      %p46 = scmp.ne.s32.totalorder %s38, %s41
      %p47 = scmp.eq.s32.totalorder %s14, 0
      %p48 = por %p46, %p47
      %p49 = scmp.ne.s32.totalorder %s38, %s41
      %p50 = scmp.eq.s32.totalorder %s19, 1
      %p51 = por %p49, %p50
      %p52 = scmp.ne.s32.totalorder %s41, %s42
      %p53 = scmp.eq.s32.totalorder %s19, 0
      %p54 = por %p52, %p53
      %p55 = scmp.ne.s32.totalorder %s41, %s42
      %p56 = scmp.eq.s32.totalorder %s20, 1
      %p57 = por %p55, %p56
      %p59 = scmp.ne.s32.totalorder %s42, %s58
      %p60 = scmp.eq.s32.totalorder %s20, 0
      %p61 = por %p59, %p60
      %s63 = sadd.s32 %s62, 1
      %p66 = scmp.eq.s32.totalorder %s14, 1
      %p67 = scmp.ne.s32.totalorder %s62, %s64
      %p68 = scmp.eq.s32.totalorder %s14, 0
      %p69 = por %p67, %p68
      %p70 = scmp.ne.s32.totalorder %s62, %s64
      %p71 = scmp.eq.s32.totalorder %s19, 1
      %p72 = por %p70, %p71
      %p73 = scmp.ne.s32.totalorder %s64, %s65
      %p74 = scmp.eq.s32.totalorder %s19, 0
      %p75 = por %p73, %p74
      %p76 = scmp.ne.s32.totalorder %s64, %s65
      %p77 = scmp.eq.s32.totalorder %s20, 1
      %p78 = por %p76, %p77
      %p80 = scmp.ne.s32.totalorder %s65, %s79
      %p81 = scmp.eq.s32.totalorder %s20, 0
      %p82 = por %p80, %p81
      %s84 = sadd.s32 %s83, 1
      %p87 = scmp.eq.s32.totalorder %s14, 1
      %p88 = scmp.ne.s32.totalorder %s83, %s85
      %p89 = scmp.eq.s32.totalorder %s14, 0
      %p90 = por %p88, %p89
      %p91 = scmp.ne.s32.totalorder %s83, %s85
      %p92 = scmp.eq.s32.totalorder %s19, 1
      %p93 = por %p91, %p92
      %p94 = scmp.ne.s32.totalorder %s85, %s86
      %p95 = scmp.eq.s32.totalorder %s19, 0
      %p96 = por %p94, %p95
      %p97 = scmp.ne.s32.totalorder %s85, %s86
      %p98 = scmp.eq.s32.totalorder %s20, 1
      %p99 = por %p97, %p98
      %p101 = scmp.ne.s32.totalorder %s86, %s100
      %p102 = scmp.eq.s32.totalorder %s20, 0
      %p103 = por %p101, %p102
      %s105 = sadd.s32 %s104, 1
      %p108 = scmp.eq.s32.totalorder %s14, 1
      %p109 = scmp.ne.s32.totalorder %s104, %s106
      %p110 = scmp.eq.s32.totalorder %s14, 0
      %p111 = por %p109, %p110
      %p112 = scmp.ne.s32.totalorder %s104, %s106
      %p113 = scmp.eq.s32.totalorder %s19, 1
      %p114 = por %p112, %p113
      %p115 = scmp.ne.s32.totalorder %s106, %s107
      %p116 = scmp.eq.s32.totalorder %s19, 0
      %p117 = por %p115, %p116
      %p118 = scmp.ne.s32.totalorder %s106, %s107
      %p119 = scmp.eq.s32.totalorder %s20, 1
      %p120 = por %p118, %p119
      %p122 = scmp.ne.s32.totalorder %s107, %s121
      %p123 = scmp.eq.s32.totalorder %s20, 0
      %p124 = por %p122, %p123
      %s126 = sadd.s32 %s125, 1
      %p129 = scmp.eq.s32.totalorder %s14, 1
      %p130 = scmp.ne.s32.totalorder %s125, %s127
      %p131 = scmp.eq.s32.totalorder %s14, 0
      %p132 = por %p130, %p131
      %p133 = scmp.ne.s32.totalorder %s125, %s127
      %p134 = scmp.eq.s32.totalorder %s19, 1
      %p135 = por %p133, %p134
      %p136 = scmp.ne.s32.totalorder %s127, %s128
      %p137 = scmp.eq.s32.totalorder %s19, 0
      %p138 = por %p136, %p137
      %p139 = scmp.ne.s32.totalorder %s127, %s128
      %p140 = scmp.eq.s32.totalorder %s20, 1
      %p141 = por %p139, %p140
      %p143 = scmp.ne.s32.totalorder %s128, %s142
      %p144 = scmp.eq.s32.totalorder %s20, 0
      %p145 = por %p143, %p144
      %s147 = sadd.s32 %s146, 1
      %p150 = scmp.eq.s32.totalorder %s14, 1
      %p151 = scmp.ne.s32.totalorder %s146, %s148
      %p152 = scmp.eq.s32.totalorder %s14, 0
      %p153 = por %p151, %p152
      %p154 = scmp.ne.s32.totalorder %s146, %s148
      %p155 = scmp.eq.s32.totalorder %s19, 1
      %p156 = por %p154, %p155
      %p157 = scmp.ne.s32.totalorder %s148, %s149
      %p158 = scmp.eq.s32.totalorder %s19, 0
      %p159 = por %p157, %p158
      %p160 = scmp.ne.s32.totalorder %s148, %s149
      %p161 = scmp.eq.s32.totalorder %s20, 1
      %p162 = por %p160, %p161
      %p164 = scmp.ne.s32.totalorder %s149, %s163
      %p165 = scmp.eq.s32.totalorder %s20, 0
      %p166 = por %p164, %p165
      %s168 = sadd.s32 %s167, 1
      %p171 = scmp.eq.s32.totalorder %s14, 1
      %p172 = scmp.ne.s32.totalorder %s167, %s169
      %p173 = scmp.eq.s32.totalorder %s14, 0
      %p174 = por %p172, %p173
      %p175 = scmp.ne.s32.totalorder %s167, %s169
      %p176 = scmp.eq.s32.totalorder %s19, 1
      %p177 = por %p175, %p176
      %p178 = scmp.ne.s32.totalorder %s169, %s170
      %p179 = scmp.eq.s32.totalorder %s19, 0
      %p180 = por %p178, %p179
      %p181 = scmp.ne.s32.totalorder %s169, %s170
      %p182 = scmp.eq.s32.totalorder %s20, 1
      %p183 = por %p181, %p182
      %p185 = scmp.ne.s32.totalorder %s170, %s184
      %p186 = scmp.eq.s32.totalorder %s20, 0
      %p187 = por %p185, %p186
      %s188 = ssub.s32 %s21, %s33
      %p189 = scmp.eq.s32.totalorder %s188, 0
      %s191 = sadd.s32 %s190, 1
      %s192 = scalar_select %p189, %s190, %s191
      %p195 = pneg %p189
      %p196 = scmp.eq.s32.totalorder %s14, 1
      %p197 = por %p195, %p196
      %p198 = scmp.ne.s32.totalorder %s190, %s193
      %p199 = scmp.eq.s32.totalorder %s14, 0
      %p200 = por %p198, %p199
      %p201 = scmp.ne.s32.totalorder %s190, %s193
      %p202 = scmp.eq.s32.totalorder %s19, 1
      %p203 = por %p201, %p202
      %p204 = scmp.ne.s32.totalorder %s193, %s194
      %p205 = scmp.eq.s32.totalorder %s19, 0
      %p206 = por %p204, %p205
      %p207 = scmp.ne.s32.totalorder %s193, %s194
      %p208 = scmp.eq.s32.totalorder %s20, 1
      %p209 = por %p207, %p208
      %p211 = scmp.ne.s32.totalorder %s194, %s210
      %p212 = scmp.eq.s32.totalorder %s20, 0
      %p213 = por %p211, %p212
      %p214 = scmp.le.s32.totalorder 1, %s14
      %p215 = scmp.lt.s32.totalorder %s14, 3
      %p216 = pnand %p214, %p215
      %p217 = pneg %p216
      // Predicated region
      $region9: #{tpu_custom_call.1} parent=5 // pred_check
        _
      $region10: #{tpu_custom_call.1} parent=5 // pred_check_branch
        %219 = sbr.rel (%p216) target = $region12
      $region11: #{tpu_custom_call.1} parent=5 // pred_region
        %s220 = ssub.s32 %s14, 1
        // Predicated region
        $region13: #{tpu_custom_call.1} parent=11 // pred_check
          %p221 = pneg %p75
        $region14: #{tpu_custom_call.1} parent=11 // pred_check_branch
          %223 = sbr.rel (%p221) target = $region16
        $region15: #{tpu_custom_call.1} parent=11 // pred_region
          _
        $region16: #{tpu_custom_call.1} parent=11 // pred_fallthru
          _
        // Predicated region
        $region17: #{tpu_custom_call.1} parent=11 // pred_check
          %p224 = pneg %p96
        $region18: #{tpu_custom_call.1} parent=11 // pred_check_branch
          %226 = sbr.rel (%p224) target = $region20
        $region19: #{tpu_custom_call.1} parent=11 // pred_region
          _
        $region20: #{tpu_custom_call.1} parent=11 // pred_fallthru
          _
        // Predicated region
        $region21: #{tpu_custom_call.1} parent=11 // pred_check
          %p227 = pneg %p117
        $region22: #{tpu_custom_call.1} parent=11 // pred_check_branch
          %229 = sbr.rel (%p227) target = $region24
        $region23: #{tpu_custom_call.1} parent=11 // pred_region
          _
        $region24: #{tpu_custom_call.1} parent=11 // pred_fallthru
          _
        // Predicated region
        $region25: #{tpu_custom_call.1} parent=11 // pred_check
          %p230 = pneg %p138
        $region26: #{tpu_custom_call.1} parent=11 // pred_check_branch
          %232 = sbr.rel (%p230) target = $region28
        $region27: #{tpu_custom_call.1} parent=11 // pred_region
          _
        $region28: #{tpu_custom_call.1} parent=11 // pred_fallthru
          _
        // Predicated region
        $region29: #{tpu_custom_call.1} parent=11 // pred_check
          %p233 = pneg %p159
        $region30: #{tpu_custom_call.1} parent=11 // pred_check_branch
          %235 = sbr.rel (%p233) target = $region32
        $region31: #{tpu_custom_call.1} parent=11 // pred_region
          _
        $region32: #{tpu_custom_call.1} parent=11 // pred_fallthru
          _
        // Predicated region
        $region33: #{tpu_custom_call.1} parent=11 // pred_check
          %p236 = pneg %p180
        $region34: #{tpu_custom_call.1} parent=11 // pred_check_branch
          %238 = sbr.rel (%p236) target = $region36
        $region35: #{tpu_custom_call.1} parent=11 // pred_region
          _
        $region36: #{tpu_custom_call.1} parent=11 // pred_fallthru
          _
      $region12: #{tpu_custom_call.1} parent=5 // pred_fallthru
        _
      %p239 = scmp.lt.s32.totalorder %s14, 2
      // Predicated region
      $region37: #{tpu_custom_call.1} parent=5 // pred_check
        %p240 = pneg %p239
      $region38: #{tpu_custom_call.1} parent=5 // pred_check_branch
        %242 = sbr.rel (%p240) target = $region40
      $region39: #{tpu_custom_call.1} parent=5 // pred_region
        // Predicated region
        $region41: #{tpu_custom_call.1} parent=39 // pred_check
          %p243 = pneg %p48
        $region42: #{tpu_custom_call.1} parent=39 // pred_check_branch
          %245 = sbr.rel (%p243) target = $region44
        $region43: #{tpu_custom_call.1} parent=39 // pred_region
          %s246 = smul.u32 16, %s21
          %p247 = scmp.lt.s32.totalorder %s22, 1
          %s248 = scalar_select %p247, %s22, 1
          %p249 = scmp.lt.s32.totalorder %s246, 15
          %s250 = scalar_select %p249, %s246, 15
          %s251 = smul.addr %s248, 16
          %s252 = sadd.s32 %s250, %s251
          %s253 = smul.addr %s252, 8
          %s254 = scalar_lea.vmem %s0, %s253
          %s255 = smul.u32 16, %s21
        $region44: #{tpu_custom_call.1} parent=39 // pred_fallthru
          _
      $region40: #{tpu_custom_call.1} parent=5 // pred_fallthru
        _
      %p256 = scmp.le.s32.totalorder 1, %s14
      %p257 = scmp.lt.s32.totalorder %s14, 3
      %p258 = pnand %p256, %p257
      %p259 = pneg %p258
      // Predicated region
      $region45: #{tpu_custom_call.1} parent=5 // pred_check
        _
      $region46: #{tpu_custom_call.1} parent=5 // pred_check_branch
        %261 = sbr.rel (%p258) target = $region48
      $region47: #{tpu_custom_call.1} parent=5 // pred_region
        %s262 = ssub.s32 %s14, 1
        %s263 = smul.u32 16, %s23
        %p264 = scmp.lt.s32.totalorder %s24, 1
        %s265 = scalar_select %p264, %s24, 1
        %p266 = scmp.lt.s32.totalorder %s263, 15
        %s267 = scalar_select %p266, %s263, 15
        %s268 = smul.addr %s265, 16
        %s269 = sadd.s32 %s267, %s268
        %s270 = smul.addr %s269, 8
        %s271 = scalar_lea.vmem %s0, %s270
        %p272 = pneg %p54
        %p273 = pneg %p51
        %p274 = pneg %p75
        %p275 = pneg %p72
        %p276 = pneg %p96
        %p277 = pneg %p93
        %p278 = pneg %p117
        %p279 = pneg %p114
        %p280 = pneg %p138
        %p281 = pneg %p135
        %p282 = pneg %p159
        %p283 = pneg %p156
        %p284 = pneg %p180
        %p285 = pneg %p177
        %p286 = pneg %p206
        %p287 = pneg %p203
        %s288 = smul.u32 16, %s23
        %p289 = scmp.lt.s32.totalorder %s24, 1
        %s290 = scalar_select %p289, %s24, 1
        %p291 = scmp.lt.s32.totalorder %s288, 15
        %s292 = scalar_select %p291, %s288, 15
        %s293 = smul.addr %s290, 16
        %s294 = sadd.s32 %s292, %s293
        %s295 = smul.addr %s294, 8
        %s296 = scalar_lea.vmem %s0, %s295
        %s297 = smul.u32 16, %s23
        %v299 = vld [vmem:[%s296] sm:$0xff]
        %v300 = vld [vmem:[%s296 + $0x8] sm:$0xff]
        %v301 = vld [vmem:[%s296 + $0x10] sm:$0xff]
        %v302 = vld [vmem:[%s296 + $0x18] sm:$0xff]
        %v303 = vld [vmem:[%s296 + $0x20] sm:$0xff]
        %v304 = vld [vmem:[%s296 + $0x28] sm:$0xff]
        %v305 = vld [vmem:[%s296 + $0x30] sm:$0xff]
        %v306 = vld [vmem:[%s296 + $0x38] sm:$0xff]
        %v307 = vld [vmem:[%s296 + $0x40] sm:$0xff]
        %v308 = vld [vmem:[%s296 + $0x48] sm:$0xff]
        %v309 = vld [vmem:[%s296 + $0x50] sm:$0xff]
        %v310 = vld [vmem:[%s296 + $0x58] sm:$0xff]
        %v311 = vld [vmem:[%s296 + $0x60] sm:$0xff]
        %v312 = vld [vmem:[%s296 + $0x68] sm:$0xff]
        %v313 = vld [vmem:[%s296 + $0x70] sm:$0xff]
        %v314 = vld [vmem:[%s296 + $0x78] sm:$0xff]
        %v315 = vld [vmem:[%s3] sm:$0x1]
        %v316 = vld [vmem:[%s4] sm:$0x1]
        %v317 = vunpack.c.l.bf16 %v315
        %319 = vset.pattern.permute.xlu0 0
        %320 = vperm.xlu0 %319, %v299
        %v321 = vpop.permute.xlu0 %320
        %324 = vset.pattern.permute.xlu0 0
        %325 = vperm.xlu0 %324, %v300
        %v326 = vpop.permute.xlu0 %325
        %329 = vset.pattern.permute.xlu0 0
        %330 = vperm.xlu0 %329, %v301
        %v331 = vpop.permute.xlu0 %330
        %334 = vset.pattern.permute.xlu0 0
        %335 = vperm.xlu0 %334, %v302
        %v336 = vpop.permute.xlu0 %335
        %339 = vset.pattern.permute.xlu0 0
        %340 = vperm.xlu0 %339, %v303
        %v341 = vpop.permute.xlu0 %340
        %344 = vset.pattern.permute.xlu0 0
        %345 = vperm.xlu0 %344, %v304
        %v346 = vpop.permute.xlu0 %345
        %349 = vset.pattern.permute.xlu0 0
        %350 = vperm.xlu0 %349, %v305
        %v351 = vpop.permute.xlu0 %350
        %354 = vset.pattern.permute.xlu0 0
        %355 = vperm.xlu0 %354, %v306
        %v356 = vpop.permute.xlu0 %355
        %359 = vset.pattern.permute.xlu0 0
        %360 = vperm.xlu0 %359, %v307
        %v361 = vpop.permute.xlu0 %360
        %364 = vset.pattern.permute.xlu0 0
        %365 = vperm.xlu0 %364, %v308
        %v366 = vpop.permute.xlu0 %365
        %369 = vset.pattern.permute.xlu0 0
        %370 = vperm.xlu0 %369, %v309
        %v371 = vpop.permute.xlu0 %370
        %374 = vset.pattern.permute.xlu0 0
        %375 = vperm.xlu0 %374, %v310
        %v376 = vpop.permute.xlu0 %375
        %379 = vset.pattern.permute.xlu0 0
        %380 = vperm.xlu0 %379, %v311
        %v381 = vpop.permute.xlu0 %380
        %384 = vset.pattern.permute.xlu0 0
        %385 = vperm.xlu0 %384, %v312
        %v386 = vpop.permute.xlu0 %385
        %389 = vset.pattern.permute.xlu0 0
        %390 = vperm.xlu0 %389, %v313
        %v391 = vpop.permute.xlu0 %390
        %394 = vset.pattern.permute.xlu0 0
        %395 = vperm.xlu0 %394, %v314
        %v396 = vpop.permute.xlu0 %395
        %v398 = vlaneseq
        %v399 = vshrl.u32 %v398, 7
        %v400 = vsub.s32 0, %v399
        %v401 = vrot.slane %v317, %v400
        %v402 = vmul.f32 %v321, %v401
        %v403 = vmul.f32 %v326, %v401
        %v404 = vmul.f32 %v331, %v401
        %v405 = vmul.f32 %v336, %v401
        %v406 = vmul.f32 %v341, %v401
        %v407 = vmul.f32 %v346, %v401
        %v408 = vmul.f32 %v351, %v401
        %v409 = vmul.f32 %v356, %v401
        %v410 = vmul.f32 %v361, %v401
        %v411 = vmul.f32 %v366, %v401
        %v412 = vmul.f32 %v371, %v401
        %v413 = vmul.f32 %v376, %v401
        %v414 = vmul.f32 %v381, %v401
        %v415 = vmul.f32 %v386, %v401
        %v416 = vmul.f32 %v391, %v401
        %v417 = vmul.f32 %v396, %v401
        %v419 = vlaneseq
        %v420 = vshrl.u32 %v419, 7
        %v421 = vsub.s32 0, %v420
        %v422 = vrot.slane %v316, %v421
        %v424 = vadd.f32 %v402, %v422
        %v425 = vadd.f32 %v403, %v422
        %v426 = vadd.f32 %v404, %v422
        %v427 = vadd.f32 %v405, %v422
        %v428 = vadd.f32 %v406, %v422
        %v429 = vadd.f32 %v407, %v422
        %v430 = vadd.f32 %v408, %v422
        %v431 = vadd.f32 %v409, %v422
        %v432 = vadd.f32 %v410, %v422
        %v433 = vadd.f32 %v411, %v422
        %v434 = vadd.f32 %v412, %v422
        %v435 = vadd.f32 %v413, %v422
        %v436 = vadd.f32 %v414, %v422
        %v437 = vadd.f32 %v415, %v422
        %v438 = vadd.f32 %v416, %v422
        %v439 = vadd.f32 %v417, %v422
        %v440 = vmax.f32 %v424, 0.0
        %v441 = vmax.f32 %v425, 0.0
        %v442 = vmax.f32 %v426, 0.0
        %v443 = vmax.f32 %v427, 0.0
        %v444 = vmax.f32 %v428, 0.0
        %v445 = vmax.f32 %v429, 0.0
        %v446 = vmax.f32 %v430, 0.0
        %v447 = vmax.f32 %v431, 0.0
        %v448 = vmax.f32 %v432, 0.0
        %v449 = vmax.f32 %v433, 0.0
        %v450 = vmax.f32 %v434, 0.0
        %v451 = vmax.f32 %v435, 0.0
        %v452 = vmax.f32 %v436, 0.0
        %v453 = vmax.f32 %v437, 0.0
        %v454 = vmax.f32 %v438, 0.0
        %v455 = vmax.f32 %v439, 0.0
        %v456 = vld [vmem:[%s5] sm:$0xf]
        %v457 = vld [vmem:[%s5 + $0x4] sm:$0xf]
        %v458 = vld [vmem:[%s5 + $0x8] sm:$0xf]
        %v459 = vld [vmem:[%s5 + $0xc] sm:$0xf]
        %v460 = vld [vmem:[%s5 + $0x10] sm:$0xf]
        %v461 = vld [vmem:[%s5 + $0x14] sm:$0xf]
        %v462 = vld [vmem:[%s5 + $0x18] sm:$0xf]
        %v463 = vld [vmem:[%s5 + $0x1c] sm:$0xf]
        %v464 = vld [vmem:[%s6] sm:$0x1]
        %v465 = vpack.c.bf16 %v441, %v440
        %v466 = vpack.c.bf16 %v443, %v442
        %v467 = vpack.c.bf16 %v445, %v444
        %v468 = vpack.c.bf16 %v447, %v446
        %v469 = vpack.c.bf16 %v449, %v448
        %v470 = vpack.c.bf16 %v451, %v450
        %v471 = vpack.c.bf16 %v453, %v452
        %v472 = vpack.c.bf16 %v455, %v454
        %v474 = vlaneseq
        %v475 = vshrl.u32 %v474, 7
        %v476 = vsub.s32 0, %v475
        %v477 = vrot.slane %v464, %v476
        %v487 = vunpack.c.l.b16 %v456
        %v488 = vunpack.c.l.b16 %v457
        %v489 = vunpack.c.l.b16 %v458
        %v490 = vunpack.c.l.b16 %v459
        %v491 = vunpack.c.l.b16 %v460
        %v492 = vunpack.c.l.b16 %v461
        %v493 = vunpack.c.l.b16 %v462
        %v494 = vunpack.c.l.b16 %v463
        %v495 = vpack.c.b16 %v488, %v487
        %v496 = vpack.c.b16 %v490, %v489
        %v497 = vpack.c.b16 %v492, %v491
        %v498 = vpack.c.b16 %v494, %v493
        %vm503 = vcmask 523264
        %v505 = vsel %vm503, %v465, 0
        %v508 = vsel %vm503, %v466, 0
        %v511 = vsel %vm503, %v467, 0
        %v514 = vsel %vm503, %v468, 0
        %v517 = vsel %vm503, %v469, 0
        %v520 = vsel %vm503, %v470, 0
        %v523 = vsel %vm503, %v471, 0
        %v526 = vsel %vm503, %v472, 0
        %528 = vmatprep.subr.bf16.mxu0 0
        %529 = vmatpush1.bf16.msra.mxu0 %v495
        %530 = vmatprep.subr.bf16.mxu0 0
        %531 = vmatpush1.bf16.msra.mxu0 %v496
        %532 = vmatprep.subr.bf16.mxu0 0
        %533 = vmatpush1.bf16.msra.mxu0 %v497
        %534 = vmatprep.subr.bf16.mxu0 0
        %535 = vmatpush1.bf16.msra.mxu0 %v498
        %536 = vmatprep.subr.bf16.mxu0 0
        %537 = vmatpush1.bf16.msra.mxu0 0
        %538 = vmatprep.subr.bf16.mxu0 0
        %539 = vmatpush1.bf16.msra.mxu0 0
        %540 = vmatprep.subr.bf16.mxu0 0
        %541 = vmatpush1.bf16.msra.mxu0 0
        %542 = vmatprep.subr.bf16.mxu0 0
        %543 = vmatpush1.bf16.msra.mxu0 0
        %544 = vmatprep.subr.bf16.mxu0 0
        %545 = vmatpush1.bf16.msra.mxu0 0
        %546 = vmatprep.subr.bf16.mxu0 0
        %547 = vmatpush1.bf16.msra.mxu0 0
        %548 = vmatprep.subr.bf16.mxu0 0
        %549 = vmatpush1.bf16.msra.mxu0 0
        %550 = vmatprep.subr.bf16.mxu0 0
        %551 = vmatpush1.bf16.msra.mxu0 0
        %552 = vmatprep.subr.bf16.mxu0 0
        %553 = vmatpush1.bf16.msra.mxu0 0
        %554 = vmatprep.subr.bf16.mxu0 0
        %555 = vmatpush1.bf16.msra.mxu0 0
        %556 = vmatprep.subr.bf16.mxu0 0
        %557 = vmatpush1.bf16.msra.mxu0 0
        %558 = vmatprep.subr.bf16.mxu0 0
        %559 = vmatpush1.bf16.msra.mxu0 0
        %560 = vmatprep.mubr.bf16.mxu0 0
        %561 = vmatmul.mubr.bf16.gmra.mrb[0].mxu0 %v505
        %v562 = vpop.f32.mrb[0].mxu0
        %v563 = vadd.f32 %v477, %v562
        %v564 = vpop.f32.mrb[0].mxu0
        %v565 = vpop.f32.mrb[0].mxu0
        %v566 = vadd.f32 %v477, %v565
        %v567 = vpop.f32.mrb[0].mxu0
        %568 = vmatprep.mubr.bf16.mxu0 0
        %569 = vmatmul.mubr.bf16.gmra.mrb[0].mxu0 %v508
        %v570 = vpop.f32.mrb[0].mxu0
        %v571 = vadd.f32 %v477, %v570
        %v572 = vpop.f32.mrb[0].mxu0
        %v573 = vpop.f32.mrb[0].mxu0
        %v574 = vadd.f32 %v477, %v573
        %v575 = vpop.f32.mrb[0].mxu0
        %576 = vmatprep.mubr.bf16.mxu0 0
        %577 = vmatmul.mubr.bf16.gmra.mrb[0].mxu0 %v511
        %v578 = vpop.f32.mrb[0].mxu0
        %v579 = vadd.f32 %v477, %v578
        %v580 = vpop.f32.mrb[0].mxu0
        %v581 = vpop.f32.mrb[0].mxu0
        %v582 = vadd.f32 %v477, %v581
        %v583 = vpop.f32.mrb[0].mxu0
        %584 = vmatprep.mubr.bf16.mxu0 0
        %585 = vmatmul.mubr.bf16.gmra.mrb[0].mxu0 %v514
        %v586 = vpop.f32.mrb[0].mxu0
        %v587 = vadd.f32 %v477, %v586
        %v588 = vpop.f32.mrb[0].mxu0
        %v589 = vpop.f32.mrb[0].mxu0
        %v590 = vadd.f32 %v477, %v589
        %v591 = vpop.f32.mrb[0].mxu0
        %592 = vmatprep.mubr.bf16.mxu0 0
        %593 = vmatmul.mubr.bf16.gmra.mrb[0].mxu0 %v517
        %v594 = vpop.f32.mrb[0].mxu0
        %v595 = vadd.f32 %v477, %v594
        %v596 = vpop.f32.mrb[0].mxu0
        %v597 = vpop.f32.mrb[0].mxu0
        %v598 = vadd.f32 %v477, %v597
        %v599 = vpop.f32.mrb[0].mxu0
        %600 = vmatprep.mubr.bf16.mxu0 0
        %601 = vmatmul.mubr.bf16.gmra.mrb[0].mxu0 %v520
        %v602 = vpop.f32.mrb[0].mxu0
        %v603 = vadd.f32 %v477, %v602
        %v604 = vpop.f32.mrb[0].mxu0
        %v605 = vpop.f32.mrb[0].mxu0
        %v606 = vadd.f32 %v477, %v605
        %v607 = vpop.f32.mrb[0].mxu0
        %608 = vmatprep.mubr.bf16.mxu0 0
        %609 = vmatmul.mubr.bf16.gmra.mrb[0].mxu0 %v523
        %v610 = vpop.f32.mrb[0].mxu0
        %v611 = vadd.f32 %v477, %v610
        %v612 = vpop.f32.mrb[0].mxu0
        %v613 = vpop.f32.mrb[0].mxu0
        %v614 = vadd.f32 %v477, %v613
        %v615 = vpop.f32.mrb[0].mxu0
        %616 = vmatprep.mubr.bf16.mxu0 0
        %617 = vmatmul.mubr.bf16.gmra.mrb[0].mxu0 %v526
        %v618 = vpop.f32.mrb[0].mxu0
        %v619 = vadd.f32 %v477, %v618
        %v620 = vpop.f32.mrb[0].mxu0
        %v621 = vpop.f32.mrb[0].mxu0
        %v622 = vadd.f32 %v477, %v621
        %v623 = vpop.f32.mrb[0].mxu0
        %624 = vdwg.mxu0
        %v625 = vmax.f32 %v563, 0.0
        %v626 = vmax.f32 %v566, 0.0
        %v627 = vmax.f32 %v571, 0.0
        %v628 = vmax.f32 %v574, 0.0
        %v629 = vmax.f32 %v579, 0.0
        %v630 = vmax.f32 %v582, 0.0
        %v631 = vmax.f32 %v587, 0.0
        %v632 = vmax.f32 %v590, 0.0
        %v633 = vmax.f32 %v595, 0.0
        %v634 = vmax.f32 %v598, 0.0
        %v635 = vmax.f32 %v603, 0.0
        %v636 = vmax.f32 %v606, 0.0
        %v637 = vmax.f32 %v611, 0.0
        %v638 = vmax.f32 %v614, 0.0
        %v639 = vmax.f32 %v619, 0.0
        %v640 = vmax.f32 %v622, 0.0
        %s641 = scalar_lea.vmem %s1, %s24
        %v642 = vld [vmem:[%s641] sm:$0x1]
        %v643 = vpack.c.bf16 %v642, %v642
        %v644 = vpack.c.bf16 %v626, %v625
        %v645 = vpack.c.bf16 %v628, %v627
        %v646 = vpack.c.bf16 %v630, %v629
        %v647 = vpack.c.bf16 %v632, %v631
        %v648 = vpack.c.bf16 %v634, %v633
        %v649 = vpack.c.bf16 %v636, %v635
        %v650 = vpack.c.bf16 %v638, %v637
        %v651 = vpack.c.bf16 %v640, %v639
        %s652 = scalar_lea.vmem %s2, %s24
        %v653 = vld [vmem:[%s652] sm:$0x1]
        %655 = vset.pattern.permute.xlu0 0
        %656 = vperm.xlu0 %655, %v653
        %v657 = vpop.permute.xlu0 %656
        %v660 = vsel %vm503, %v643, 0
        %v663 = vsel %vm503, %v644, 0
        %v666 = vsel %vm503, %v645, 0
        %v669 = vsel %vm503, %v646, 0
        %v672 = vsel %vm503, %v647, 0
        %v675 = vsel %vm503, %v648, 0
        %v678 = vsel %vm503, %v649, 0
        %v681 = vsel %vm503, %v650, 0
        %v684 = vsel %vm503, %v651, 0
        %686 = vmatprep.subr.bf16.mxu0 0
        %687 = vmatpush1.bf16.xpose.msra.mxu0 %v663
        %688 = vmatprep.subr.bf16.mxu0 0
        %689 = vmatpush1.bf16.xpose.msra.mxu0 %v666
        %690 = vmatprep.subr.bf16.mxu0 0
        %691 = vmatpush1.bf16.xpose.msra.mxu0 %v669
        %692 = vmatprep.subr.bf16.mxu0 0
        %693 = vmatpush1.bf16.xpose.msra.mxu0 %v672
        %694 = vmatprep.subr.bf16.mxu0 0
        %695 = vmatpush1.bf16.xpose.msra.mxu0 %v675
        %696 = vmatprep.subr.bf16.mxu0 0
        %697 = vmatpush1.bf16.xpose.msra.mxu0 %v678
        %698 = vmatprep.subr.bf16.mxu0 0
        %699 = vmatpush1.bf16.xpose.msra.mxu0 %v681
        %700 = vmatprep.subr.bf16.mxu0 0
        %701 = vmatpush1.bf16.xpose.msra.mxu0 %v684
        %702 = vmatprep.subr.bf16.mxu0 0
        %703 = vmatpush1.bf16.xpose.msra.mxu0 0
        %704 = vmatprep.subr.bf16.mxu0 0
        %705 = vmatpush1.bf16.xpose.msra.mxu0 0
        %706 = vmatprep.subr.bf16.mxu0 0
        %707 = vmatpush1.bf16.xpose.msra.mxu0 0
        %708 = vmatprep.subr.bf16.mxu0 0
        %709 = vmatpush1.bf16.xpose.msra.mxu0 0
        %710 = vmatprep.subr.bf16.mxu0 0
        %711 = vmatpush1.bf16.xpose.msra.mxu0 0
        %712 = vmatprep.subr.bf16.mxu0 0
        %713 = vmatpush1.bf16.xpose.msra.mxu0 0
        %714 = vmatprep.subr.bf16.mxu0 0
        %715 = vmatpush1.bf16.xpose.msra.mxu0 0
        %716 = vmatprep.subr.bf16.mxu0 0
        %717 = vmatpush1.bf16.xpose.msra.mxu0 0
        %718 = vmatprep.mubr.bf16.mxu0 0
        %719 = vmatmul.mubr.bf16.gmra.mrb[0].mxu0 %v660
        %v720 = vpop.f32.mrb[0].mxu0
        %v721 = vadd.f32 %v657, %v720
        %v722 = vpop.f32.mrb[0].mxu0
        %v723 = vpop.f32.mrb[0].mxu0
        %v724 = vpop.f32.mrb[0].mxu0
        %725 = vdwg.mxu0
        %s726 = scalar_lea.vmem [#allocation2], %s24
        %727 = vst [vmem:[%s726] sm:$0x1] %v721
        %p728 = scmp.eq.s32.totalorder %s24, 1
        // Predicated region
        $region49: #{tpu_custom_call.1} parent=47 // pred_check
          %p729 = pneg %p728
        $region50: #{tpu_custom_call.1} parent=47 // pred_check_branch
          %731 = sbr.rel (%p729) target = $region52
        $region51: #{tpu_custom_call.1} parent=47 // pred_region
          %v732 = vld [vmem:[#allocation2] sm:$0x3]
          %733 = vst [vmem:[#allocation3] sm:$0x3] %v732
        $region52: #{tpu_custom_call.1} parent=47 // pred_fallthru
          _
        // Predicated region
        $region53: #{tpu_custom_call.1} parent=47 // pred_check
          %p734 = pneg %p203
        $region54: #{tpu_custom_call.1} parent=47 // pred_check_branch
          %736 = sbr.rel (%p734) target = $region56
        $region55: #{tpu_custom_call.1} parent=47 // pred_region
          %s738 = ssub.s32 32, 32
          %739 = vsyncadd [#allocation4], %s738
          %s740 = smul.addr %s23, 32
          %s741 = scalar_lea.hbm %s7, %s740
          %s743 = sshll.u32 [#allocation3], 4
          %s744 = int_to_ptr.vmem [resolvable:$true] %s743
          %746 = dma.vmem_to_hbm [thread:$0]  %s744, 32, %s741, [#allocation4]
        $region56: #{tpu_custom_call.1} parent=47 // pred_fallthru
          _
        // Predicated region
        $region57: #{tpu_custom_call.1} parent=47 // pred_check
          %p747 = pneg %p203
        $region58: #{tpu_custom_call.1} parent=47 // pred_check_branch
          %749 = sbr.rel (%p747) target = $region60
        $region59: #{tpu_custom_call.1} parent=47 // pred_region
          %750 = dma.done [#allocation4], 32
        $region60: #{tpu_custom_call.1} parent=47 // pred_fallthru
          _
      $region48: #{tpu_custom_call.1} parent=5 // pred_fallthru
        _
      %p751 = scmp.le.s32.totalorder 2, %s14
      // Predicated region
      $region61: #{tpu_custom_call.1} parent=5 // pred_check
        %p752 = pneg %p751
      $region62: #{tpu_custom_call.1} parent=5 // pred_check_branch
        %754 = sbr.rel (%p752) target = $region64
      $region63: #{tpu_custom_call.1} parent=5 // pred_region
        %s755 = ssub.s32 %s14, 2
      $region64: #{tpu_custom_call.1} parent=5 // pred_fallthru
        _
    $region6: #{tpu_custom_call.1} parent=1 // loop_footer
      %s18 = sadd.s32 1, %s14
    $region7: #{tpu_custom_call.1} parent=1 // loop_footer_branch
      %13 = sbr.rel target = $region3
    $region8: #{tpu_custom_call.1} parent=1 // loop_exit
      _
    %756 = vsyncpa [#allocation4], 1
    %s757 = scalar_lea.sflag [#allocation4], 1
    %758 = vsyncpa %s757, 1

</llo_original>
